<compile_context>
chip_gen: v5e
topology: v5e:2x2
jax: 0.10.0
libtpu: 0.0.40
codegen_flags: <defaults>
</compile_context>

<pallas_src>
import functools

import jax
import jax.numpy as jnp
from jax.experimental import pallas as pl
from jax.experimental.pallas import tpu as pltpu


# ----------------------------------------------------------------------------
# Kernel 1: fused synthetic vision encoder + projection MLP.
#   grid = (N images, S tiles); weights VMEM-resident; bf16 MXU, f32 epilogue.
# ----------------------------------------------------------------------------
def _enc_proj_kernel(patch_ref, bias_type_ref,
                     w_emb_ref, g_ref, beta_ref,
                     w1_ref, b1_ref, w2_ref, b2_ref,
                     hid_ref, pool_ref, *, inv_s):
    s = pl.program_id(1)
    x = patch_ref[0]                                                    # (tS, Pp) bf16
    h = jnp.dot(x, w_emb_ref[...], preferred_element_type=jnp.float32)  # (tS, H) f32
    h = h + bias_type_ref[0]                                            # bias + type (1,H)

    # one-pass LayerNorm statistics: var = E[x^2] - mean^2
    mu = jnp.mean(h, axis=-1, keepdims=True)
    var = jnp.mean(h * h, axis=-1, keepdims=True) - mu * mu
    h = (h - mu) * jax.lax.rsqrt(var + 1e-5)
    h = h * g_ref[...] + beta_ref[...]

    # pooler = mean over the full S of post-LN hidden; accumulate across S tiles
    # (pooler output block is VMEM-resident across the "arbitrary" S axis).
    @pl.when(s == 0)
    def _():
        pool_ref[...] = jnp.zeros_like(pool_ref)

    pool_ref[0] += jnp.sum(h, axis=0, keepdims=True)

    @pl.when(s == pl.num_programs(1) - 1)
    def _():
        pool_ref[...] = pool_ref[...] * inv_s

    # projection MLP: bf16 matmul operands, f32 accumulate + epilogue, tanh GELU (EUP).
    h1 = jnp.dot(h.astype(jnp.bfloat16), w1_ref[...],
                 preferred_element_type=jnp.float32) + b1_ref[...]
    h1 = jax.nn.gelu(h1, approximate=True)
    y = jnp.dot(h1.astype(jnp.bfloat16), w2_ref[...],
                preferred_element_type=jnp.float32) + b2_ref[...]
    hid_ref[0] = y.astype(hid_ref.dtype)


def _choose_s_tile(S):
    if S <= 512:
        return S
    for cand in (512, 384, 256, 128, 64, 32, 16):   # multiples of 16 (bf16 sublane pack)
        if S % cand == 0:
            return cand
    return S


def fused_encode(pixels, bias_type, enc_params, proj_params, patch,
                 hid_dtype=jnp.float32):
    """pixels NCHW -> (last_hidden (N,S,D) hid_dtype, pooler (N,1,H) f32)."""
    N, C, Hi, Wi = pixels.shape
    Sh, Sw = Hi // patch, Wi // patch
    S = Sh * Sw
    P = C * patch * patch
    Pp, H = enc_params["w_emb"].shape          # padded, lane-aligned contraction dim
    Dm = proj_params["w1"].shape[1]
    D = proj_params["w2"].shape[1]

    # NCHW -> (N, S, C*p*p), zero-pad K to Pp, cast activations to bf16 (layout glue).
    patches = pixels.reshape(N, C, Sh, patch, Sw, patch)
    patches = patches.transpose(0, 2, 4, 1, 3, 5).reshape(N, S, P)
    patches = jnp.pad(patches, ((0, 0), (0, 0), (0, Pp - P))).astype(jnp.bfloat16)

    tS = _choose_s_tile(S)
    n_s = S // tS

    kernel = functools.partial(_enc_proj_kernel, inv_s=1.0 / float(S))
    hid, pool = pl.pallas_call(
        kernel,
        out_shape=(jax.ShapeDtypeStruct((N, S, D), hid_dtype),
                   jax.ShapeDtypeStruct((N, 1, H), jnp.float32)),
        grid=(N, n_s),
        in_specs=[
            pl.BlockSpec((1, tS, Pp), lambda n, s: (n, s, 0)),   # patches (bf16)
            pl.BlockSpec((1, 1, H), lambda n, s: (n, 0, 0)),     # bias + type embedding
            pl.BlockSpec((Pp, H), lambda n, s: (0, 0)),          # w_emb (bf16)
            pl.BlockSpec((1, H), lambda n, s: (0, 0)),           # ln gamma
            pl.BlockSpec((1, H), lambda n, s: (0, 0)),           # ln beta
            pl.BlockSpec((H, Dm), lambda n, s: (0, 0)),          # w1 (bf16)
            pl.BlockSpec((1, Dm), lambda n, s: (0, 0)),          # b1
            pl.BlockSpec((Dm, D), lambda n, s: (0, 0)),          # w2 (bf16)
            pl.BlockSpec((1, D), lambda n, s: (0, 0)),           # b2
        ],
        out_specs=(pl.BlockSpec((1, tS, D), lambda n, s: (n, s, 0)),
                   pl.BlockSpec((1, 1, H), lambda n, s: (n, 0, 0))),
        compiler_params=pltpu.CompilerParams(
            dimension_semantics=("parallel", "arbitrary"),
            vmem_limit_bytes=64 * 1024 * 1024),
    )(patches, bias_type, enc_params["w_emb"],
      enc_params["ln_g"], enc_params["ln_b"],
      proj_params["w1"], proj_params["b1"], proj_params["w2"], proj_params["b2"])
    return hid, pool


# ----------------------------------------------------------------------------
# Kernel 2: scalar-prefetched gather. For each (report b, slot i) only the
#           selected image's (S, D) hidden tile and (1, H) pooler row are DMA'd
#           (index_map reads gather_index from SMEM). Mask applied as a scalar
#           multiply; masked pooler sum accumulated over the i axis.
# ----------------------------------------------------------------------------
def _gather_kernel(gidx_ref, mask_ref, hid_ref, pool_ref,
                   out_hid_ref, out_pool_ref):
    b = pl.program_id(0)
    i = pl.program_id(1)
    m = mask_ref[b, i].astype(jnp.float32)
    out_hid_ref[0, 0] = (hid_ref[0] * m).astype(out_hid_ref.dtype)

    @pl.when(i == 0)
    def _():
        out_pool_ref[...] = jnp.zeros_like(out_pool_ref)

    out_pool_ref[0] += pool_ref[0] * m


def gather_and_pool(gather_index, image_mask, last_hidden, pooler3):
    B, I = gather_index.shape
    N, S, D = last_hidden.shape
    H = pooler3.shape[-1]
    mask_f = image_mask.astype(jnp.float32)
    mask_i = (mask_f > 0).astype(jnp.int32)   # TODO(synk): assumes binary image_mask

    out_hid, pool_sum = pl.pallas_call(
        _gather_kernel,
        out_shape=(jax.ShapeDtypeStruct((B, I, S, D), jnp.float32),
                   jax.ShapeDtypeStruct((B, 1, H), jnp.float32)),
        grid_spec=pltpu.PrefetchScalarGridSpec(
            num_scalar_prefetch=2,
            grid=(B, I),
            in_specs=[
                pl.BlockSpec((1, S, D), lambda b, i, gidx, msk: (gidx[b, i], 0, 0)),
                pl.BlockSpec((1, 1, H), lambda b, i, gidx, msk: (gidx[b, i], 0, 0)),
            ],
            out_specs=(
                pl.BlockSpec((1, 1, S, D), lambda b, i, gidx, msk: (b, i, 0, 0)),
                pl.BlockSpec((1, 1, H), lambda b, i, gidx, msk: (b, 0, 0)),
            ),
        ),
        compiler_params=pltpu.CompilerParams(
            dimension_semantics=("parallel", "arbitrary")),
    )(gather_index.astype(jnp.int32), mask_i, last_hidden, pooler3)

    # Tiny plain-JAX epilogue: masked-mean division and attention-mask broadcast
    # (kept outside the kernel so all kernel outputs stay lane-dense / simple).
    norm = jnp.sum(mask_f, axis=1, keepdims=True)
    safe = jnp.where(norm > 0, norm, 1.0)
    pool_out = pool_sum[:, 0, :] / safe
    flat_hidden = out_hid.reshape(B, I * S, D)
    flat_mask = jnp.broadcast_to(mask_f[:, :, None], (B, I, S)).reshape(B, I * S)
    return flat_hidden, pool_out, flat_mask


# ----------------------------------------------------------------------------
# VisionEncoder wrapper (parameter setup + control-flow glue in plain JAX)
# ----------------------------------------------------------------------------
class VisionEncoderPallas:
    def __init__(self, num_observation, hidden, d_model, patch, channels, key):
        self.num_observation = num_observation
        self.patch = patch
        P = channels * patch * patch
        Pp = max(128, ((P + 127) // 128) * 128)     # MXU/lane-aligned contraction dim
        ks = jax.random.split(key, 6)

        def lin(k, i, o, scale=0.02):
            return scale * jax.random.normal(k, (i, o), jnp.float32)

        def enc_params(k):
            (k1,) = jax.random.split(k, 1)
            w = jnp.pad(lin(k1, P, hidden), ((0, Pp - P), (0, 0)))  # zero padded-K rows
            return dict(w_emb=w.astype(jnp.bfloat16),
                        b_emb=jnp.zeros((1, hidden), jnp.float32),
                        ln_g=jnp.ones((1, hidden), jnp.float32),
                        ln_b=jnp.zeros((1, hidden), jnp.float32))

        def proj_params(k):
            k1, k2 = jax.random.split(k, 2)
            # nn.Linear stored as (in, out) matrices (synthetic deterministic init)
            return dict(w1=lin(k1, hidden, d_model).astype(jnp.bfloat16),
                        b1=jnp.zeros((1, d_model), jnp.float32),
                        w2=lin(k2, d_model, d_model).astype(jnp.bfloat16),
                        b2=jnp.zeros((1, d_model), jnp.float32))

        self.vision_params = enc_params(ks[0])      # self.vision_encoder
        self.lesion_params = enc_params(ks[1])      # self.lesion_encoder
        self.current_proj = proj_params(ks[2])
        self.prior_proj = proj_params(ks[3])
        self.lesion_proj = proj_params(ks[4])
        emb = 0.02 * jax.random.normal(ks[5], (num_observation + 2, hidden), jnp.float32)
        self.embed_image_types = emb.at[num_observation + 1].set(0.0)  # padding_idx row
        # TODO(synk): inspect_head is only used in the training-only branch; not instantiated.

    def encode(self, input_pixels, image_mask, gather_index, encoder_params,
               image_types, projection_params):
        # fold the patch-embed bias into the per-image type embedding (one tiny add).
        bias_type = image_types + encoder_params["b_emb"][None]        # (N,1,H)
        do_gather = gather_index is not None and image_mask is not None
        # bf16 intermediate halves HBM traffic between the two kernels; final outputs
        # returned to the caller stay f32.
        hid_dtype = jnp.bfloat16 if do_gather else jnp.float32
        last_hidden, pooler3 = fused_encode(
            input_pixels, bias_type, encoder_params, projection_params,
            self.patch, hid_dtype=hid_dtype)
        if do_gather:
            return gather_and_pool(gather_index, image_mask, last_hidden, pooler3)
        image_attention_mask = jnp.ones(last_hidden.shape[:2], jnp.float32)
        return last_hidden, pooler3[:, 0, :], image_attention_mask

    def forward(self, input_pixels=None, image_mask=None, gather_index=None,
                prior_input_pixels=None, prior_image_mask=None, prior_gather_index=None,
                patch_input_pixels=None, patch_image_mask=None, patch_gather_index=None,
                patch_context_index=None, patch_labels=None):
        encoder_hidden_states = []
        encoder_attention_mask = []

        N = input_pixels.shape[0]
        types = self.embed_image_types[jnp.ones((N,), jnp.int32)][:, None, :]   # (N,1,H)
        flat_h, pooler_output, attn = self.encode(
            input_pixels, image_mask, gather_index,
            self.vision_params, types, self.current_proj)
        encoder_hidden_states.append(flat_h)
        encoder_attention_mask.append(attn)

        # TODO(synk): runtime `*_image_mask.sum() > 0` guards are hoisted to static
        # presence checks to avoid device->host syncs between pallas_calls.
        if prior_input_pixels is not None and prior_image_mask is not None:
            Np = prior_input_pixels.shape[0]
            types = self.embed_image_types[jnp.zeros((Np,), jnp.int32)][:, None, :]
            p_h, _prior_pool, p_attn = self.encode(
                prior_input_pixels, prior_image_mask, prior_gather_index,
                self.vision_params, types, self.prior_proj)
            encoder_hidden_states.append(p_h)
            encoder_attention_mask.append(p_attn)

        lesion_hidden_states = None
        lesion_inspect_logits = None
        lesion_attention_mask = None
        if patch_input_pixels is not None and patch_image_mask is not None:
            type_ids = patch_labels.astype(jnp.int32).reshape(-1) + 2
            types = self.embed_image_types[type_ids][:, None, :]
            lesion_hidden_states, _lesion_pool, lesion_attention_mask = self.encode(
                patch_input_pixels, None, None,
                self.lesion_params, types, self.lesion_proj)
            # TODO(synk): training-only inspect_head path (per-label heads + ragged
            # pad_sequence logits) not implemented; inference semantics return None.

        return (encoder_hidden_states, encoder_attention_mask,
                lesion_hidden_states, lesion_inspect_logits, lesion_attention_mask)


if __name__ == "__main__":
    key = jax.random.PRNGKey(0)
    k_model, k1, k2, k3 = jax.random.split(key, 4)

    N, C, HW = 4, 4, 16      # flat images, channels, spatial
    B, I = 2, 2              # reports, images per report
    M = 2                    # lesion patches
    hidden, d_model, patch = 32, 32, 4
    num_observation = 5

    model = VisionEncoderPallas(num_observation=num_observation, hidden=hidden,
                                d_model=d_model, patch=patch, channels=C, key=k_model)

    input_pixels = jax.random.normal(k1, (N, C, HW, HW), jnp.float32)
    image_mask = jnp.array([[1.0, 1.0], [1.0, 0.0]], jnp.float32)
    gather_index = jnp.array([[0, 1], [2, 3]], jnp.int32)

    prior_input_pixels = jax.random.normal(k2, (N, C, HW, HW), jnp.float32)
    prior_image_mask = jnp.array([[1.0, 0.0], [1.0, 1.0]], jnp.float32)
    prior_gather_index = jnp.array([[1, 0], [3, 2]], jnp.int32)

    patch_input_pixels = jax.random.normal(k3, (M, C, HW, HW), jnp.float32)
    patch_image_mask = jnp.ones((M,), jnp.float32)
    patch_labels = jnp.array([[0], [2]], jnp.int32)
    patch_context_index = jnp.array([0, 1], jnp.int32)

    outs = model.forward(
        input_pixels=input_pixels, image_mask=image_mask, gather_index=gather_index,
        prior_input_pixels=prior_input_pixels, prior_image_mask=prior_image_mask,
        prior_gather_index=prior_gather_index,
        patch_input_pixels=patch_input_pixels, patch_image_mask=patch_image_mask,
        patch_context_index=patch_context_index, patch_labels=patch_labels)

    for leaf in jax.tree_util.tree_leaves(outs):
        jax.block_until_ready(leaf)
    print("KERNEL_OK")
</pallas_src>

<mosaic_0001>
module attributes {stable_mosaic.version = 11 : i64} {
  func.func @_enc_proj_kernel(%arg0: i32, %arg1: i32, %arg2: memref<1x16x128xbf16, #tpu.memory_space<vmem>>, %arg3: memref<1x1x32xf32, #tpu.memory_space<vmem>>, %arg4: memref<128x32xbf16, #tpu.memory_space<vmem>>, %arg5: memref<1x32xf32, #tpu.memory_space<vmem>>, %arg6: memref<1x32xf32, #tpu.memory_space<vmem>>, %arg7: memref<32x32xbf16, #tpu.memory_space<vmem>>, %arg8: memref<1x32xf32, #tpu.memory_space<vmem>>, %arg9: memref<32x32xbf16, #tpu.memory_space<vmem>>, %arg10: memref<1x32xf32, #tpu.memory_space<vmem>>, %arg11: memref<1x16x32xbf16, #tpu.memory_space<vmem>>, %arg12: memref<1x1x32xf32, #tpu.memory_space<vmem>>) attributes {dimension_semantics = [#tpu.dimension_semantics<parallel>, #tpu.dimension_semantics<arbitrary>], iteration_bounds = array<i64: 4, 1>, scalar_prefetch = 0 : i64, scratch_operands = 0 : i64, tpu.core_type = #tpu.core_type<tc>, window_params = [{transform_indices = @transform_0, window_bounds = array<i64: 1, 16, 128>}, {transform_indices = @transform_1, window_bounds = array<i64: 1, 1, 32>}, {pipeline_mode = #tpu.pipeline_mode<synchronous>, transform_indices = @transform_2, window_bounds = array<i64: 128, 32>}, {pipeline_mode = #tpu.pipeline_mode<synchronous>, transform_indices = @transform_3, window_bounds = array<i64: 1, 32>}, {pipeline_mode = #tpu.pipeline_mode<synchronous>, transform_indices = @transform_4, window_bounds = array<i64: 1, 32>}, {pipeline_mode = #tpu.pipeline_mode<synchronous>, transform_indices = @transform_5, window_bounds = array<i64: 32, 32>}, {pipeline_mode = #tpu.pipeline_mode<synchronous>, transform_indices = @transform_6, window_bounds = array<i64: 1, 32>}, {pipeline_mode = #tpu.pipeline_mode<synchronous>, transform_indices = @transform_7, window_bounds = array<i64: 32, 32>}, {pipeline_mode = #tpu.pipeline_mode<synchronous>, transform_indices = @transform_8, window_bounds = array<i64: 1, 32>}, {transform_indices = @transform_9, window_bounds = array<i64: 1, 16, 32>}, {transform_indices = @transform_10, window_bounds = array<i64: 1, 1, 32>}]} {
    %c0 = arith.constant 0 : index
    %c0_0 = arith.constant 0 : index
    %c0_1 = arith.constant 0 : index
    %0 = vector.load %arg2[%c0, %c0_0, %c0_1] : memref<1x16x128xbf16, #tpu.memory_space<vmem>>, vector<1x16x128xbf16>
    %1 = vector.shape_cast %0 : vector<1x16x128xbf16> to vector<16x128xbf16>
    %c0_2 = arith.constant 0 : index
    %c0_3 = arith.constant 0 : index
    %2 = vector.load %arg4[%c0_2, %c0_3] : memref<128x32xbf16, #tpu.memory_space<vmem>>, vector<128x32xbf16>
    %cst = arith.constant dense<0.000000e+00> : vector<16x32xf32>
    %3 = tpu.matmul %1, %2, %cst {dimension_numbers = #tpu.dot_dimension_numbers<[1], [0], [0], [1], [0, 0, 1, 1], [], []>} : vector<16x128xbf16>, vector<128x32xbf16>, vector<16x32xf32> -> vector<16x32xf32>
    %c0_4 = arith.constant 0 : index
    %c0_5 = arith.constant 0 : index
    %c0_6 = arith.constant 0 : index
    %4 = vector.load %arg3[%c0_4, %c0_5, %c0_6] : memref<1x1x32xf32, #tpu.memory_space<vmem>>, vector<1x1x32xf32>
    %5 = vector.shape_cast %4 : vector<1x1x32xf32> to vector<1x32xf32>
    %6 = vector.broadcast %5 : vector<1x32xf32> to vector<16x32xf32>
    %7 = arith.addf %3, %6 : vector<16x32xf32>
    %cst_7 = arith.constant dense<0.000000e+00> : vector<16xf32>
    %8 = vector.multi_reduction <add>, %7, %cst_7 [1] : vector<16x32xf32> to vector<16xf32>
    %9 = vector.shape_cast %8 : vector<16xf32> to vector<16x1xf32>
    %cst_8 = arith.constant 3.200000e+01 : f32
    %10 = vector.broadcast %cst_8 : f32 to vector<16x1xf32>
    %11 = arith.divf %9, %10 : vector<16x1xf32>
    %12 = arith.mulf %7, %7 : vector<16x32xf32>
    %cst_9 = arith.constant dense<0.000000e+00> : vector<16xf32>
    %13 = vector.multi_reduction <add>, %12, %cst_9 [1] : vector<16x32xf32> to vector<16xf32>
    %14 = vector.shape_cast %13 : vector<16xf32> to vector<16x1xf32>
    %cst_10 = arith.constant 3.200000e+01 : f32
    %15 = vector.broadcast %cst_10 : f32 to vector<16x1xf32>
    %16 = arith.divf %14, %15 : vector<16x1xf32>
    %17 = arith.mulf %11, %11 : vector<16x1xf32>
    %18 = arith.subf %16, %17 : vector<16x1xf32>
    %19 = vector.broadcast %11 : vector<16x1xf32> to vector<16x32xf32>
    %20 = arith.subf %7, %19 : vector<16x32xf32>
    %cst_11 = arith.constant 9.99999974E-6 : f32
    %21 = vector.broadcast %cst_11 : f32 to vector<16x1xf32>
    %22 = arith.addf %18, %21 : vector<16x1xf32>
    %23 = math.rsqrt %22 : vector<16x1xf32>
    %24 = vector.broadcast %23 : vector<16x1xf32> to vector<16x32xf32>
    %25 = arith.mulf %20, %24 : vector<16x32xf32>
    %c0_12 = arith.constant 0 : index
    %c0_13 = arith.constant 0 : index
    %26 = vector.load %arg5[%c0_12, %c0_13] : memref<1x32xf32, #tpu.memory_space<vmem>>, vector<1x32xf32>
    %27 = vector.broadcast %26 : vector<1x32xf32> to vector<16x32xf32>
    %28 = arith.mulf %25, %27 : vector<16x32xf32>
    %c0_14 = arith.constant 0 : index
    %c0_15 = arith.constant 0 : index
    %29 = vector.load %arg6[%c0_14, %c0_15] : memref<1x32xf32, #tpu.memory_space<vmem>>, vector<1x32xf32>
    %30 = vector.broadcast %29 : vector<1x32xf32> to vector<16x32xf32>
    %31 = arith.addf %28, %30 : vector<16x32xf32>
    %c0_i32 = arith.constant 0 : i32
    %32 = arith.cmpi eq, %arg1, %c0_i32 : i32
    %33 = arith.extui %32 : i1 to i32
    %c0_i32_16 = arith.constant 0 : i32
    %34 = arith.cmpi ne, %33, %c0_i32_16 : i32
    scf.if %34 {
      %cst_43 = arith.constant 0.000000e+00 : f32
      %75 = vector.broadcast %cst_43 : f32 to vector<1x1x32xf32>
      %c0_44 = arith.constant 0 : index
      %c0_45 = arith.constant 0 : index
      %c0_46 = arith.constant 0 : index
      %76 = vector.load %arg12[%c0_44, %c0_45, %c0_46] : memref<1x1x32xf32, #tpu.memory_space<vmem>>, vector<1x1x32xf32>
      tpu.vector_store %arg12[%c0_44, %c0_45, %c0_46], %75 {strides = array<i32>} : memref<1x1x32xf32, #tpu.memory_space<vmem>>, vector<1x1x32xf32>,
    } else {
    }
    %c0_17 = arith.constant 0 : index
    %c0_18 = arith.constant 0 : index
    %c0_19 = arith.constant 0 : index
    %35 = vector.load %arg12[%c0_17, %c0_18, %c0_19] : memref<1x1x32xf32, #tpu.memory_space<vmem>>, vector<1x1x32xf32>
    %36 = vector.shape_cast %35 : vector<1x1x32xf32> to vector<1x32xf32>
    %cst_20 = arith.constant dense<0.000000e+00> : vector<32xf32>
    %37 = vector.multi_reduction <add>, %31, %cst_20 [0] : vector<16x32xf32> to vector<32xf32>
    %38 = vector.shape_cast %37 : vector<32xf32> to vector<1x32xf32>
    %39 = arith.addf %36, %38 : vector<1x32xf32>
    %c0_21 = arith.constant 0 : index
    %c0_22 = arith.constant 0 : index
    %c0_23 = arith.constant 0 : index
    %40 = vector.load %arg12[%c0_21, %c0_22, %c0_23] : memref<1x1x32xf32, #tpu.memory_space<vmem>>, vector<1x1x32xf32>
    %41 = vector.shape_cast %40 : vector<1x1x32xf32> to vector<1x32xf32>
    %42 = vector.shape_cast %39 : vector<1x32xf32> to vector<1x1x32xf32>
    tpu.vector_store %arg12[%c0_21, %c0_22, %c0_23], %42 {strides = array<i32>} : memref<1x1x32xf32, #tpu.memory_space<vmem>>, vector<1x1x32xf32>,
    %c0_i32_24 = arith.constant 0 : i32
    %43 = arith.cmpi eq, %arg1, %c0_i32_24 : i32
    %44 = arith.extui %43 : i1 to i32
    %c0_i32_25 = arith.constant 0 : i32
    %45 = arith.cmpi ne, %44, %c0_i32_25 : i32
    scf.if %45 {
      %c0_43 = arith.constant 0 : index
      %c0_44 = arith.constant 0 : index
      %c0_45 = arith.constant 0 : index
      %75 = vector.load %arg12[%c0_43, %c0_44, %c0_45] : memref<1x1x32xf32, #tpu.memory_space<vmem>>, vector<1x1x32xf32>
      %cst_46 = arith.constant 6.250000e-02 : f32
      %76 = vector.broadcast %cst_46 : f32 to vector<1x1x32xf32>
      %77 = arith.mulf %75, %76 : vector<1x1x32xf32>
      %c0_47 = arith.constant 0 : index
      %c0_48 = arith.constant 0 : index
      %c0_49 = arith.constant 0 : index
      %78 = vector.load %arg12[%c0_47, %c0_48, %c0_49] : memref<1x1x32xf32, #tpu.memory_space<vmem>>, vector<1x1x32xf32>
      tpu.vector_store %arg12[%c0_47, %c0_48, %c0_49], %77 {strides = array<i32>} : memref<1x1x32xf32, #tpu.memory_space<vmem>>, vector<1x1x32xf32>,
    } else {
    }
    %46 = arith.truncf %31 : vector<16x32xf32> to vector<16x32xbf16>
    %c0_26 = arith.constant 0 : index
    %c0_27 = arith.constant 0 : index
    %47 = vector.load %arg7[%c0_26, %c0_27] : memref<32x32xbf16, #tpu.memory_space<vmem>>, vector<32x32xbf16>
    %cst_28 = arith.constant dense<0.000000e+00> : vector<16x32xf32>
    %48 = tpu.matmul %46, %47, %cst_28 {dimension_numbers = #tpu.dot_dimension_numbers<[1], [0], [0], [1], [0, 0, 1, 1], [], []>} : vector<16x32xbf16>, vector<32x32xbf16>, vector<16x32xf32> -> vector<16x32xf32>
    %c0_29 = arith.constant 0 : index
    %c0_30 = arith.constant 0 : index
    %49 = vector.load %arg8[%c0_29, %c0_30] : memref<1x32xf32, #tpu.memory_space<vmem>>, vector<1x32xf32>
    %50 = vector.broadcast %49 : vector<1x32xf32> to vector<16x32xf32>
    %51 = arith.addf %48, %50 : vector<16x32xf32>
    %52 = arith.mulf %51, %51 : vector<16x32xf32>
    %53 = arith.mulf %51, %52 : vector<16x32xf32>
    %cst_31 = arith.constant 4.471500e-02 : f32
    %54 = vector.broadcast %cst_31 : f32 to vector<16x32xf32>
    %55 = arith.mulf %54, %53 : vector<16x32xf32>
    %56 = arith.addf %51, %55 : vector<16x32xf32>
    %cst_32 = arith.constant 0.797884583 : f32
    %57 = vector.broadcast %cst_32 : f32 to vector<16x32xf32>
    %58 = arith.mulf %57, %56 : vector<16x32xf32>
    %59 = math.tanh %58 : vector<16x32xf32>
    %cst_33 = arith.constant 1.000000e+00 : f32
    %60 = vector.broadcast %cst_33 : f32 to vector<16x32xf32>
    %61 = arith.addf %60, %59 : vector<16x32xf32>
    %cst_34 = arith.constant 5.000000e-01 : f32
    %62 = vector.broadcast %cst_34 : f32 to vector<16x32xf32>
    %63 = arith.mulf %62, %61 : vector<16x32xf32>
    %64 = arith.mulf %51, %63 : vector<16x32xf32>
    %65 = arith.truncf %64 : vector<16x32xf32> to vector<16x32xbf16>
    %c0_35 = arith.constant 0 : index
    %c0_36 = arith.constant 0 : index
    %66 = vector.load %arg9[%c0_35, %c0_36] : memref<32x32xbf16, #tpu.memory_space<vmem>>, vector<32x32xbf16>
    %cst_37 = arith.constant dense<0.000000e+00> : vector<16x32xf32>
    %67 = tpu.matmul %65, %66, %cst_37 {dimension_numbers = #tpu.dot_dimension_numbers<[1], [0], [0], [1], [0, 0, 1, 1], [], []>} : vector<16x32xbf16>, vector<32x32xbf16>, vector<16x32xf32> -> vector<16x32xf32>
    %c0_38 = arith.constant 0 : index
    %c0_39 = arith.constant 0 : index
    %68 = vector.load %arg10[%c0_38, %c0_39] : memref<1x32xf32, #tpu.memory_space<vmem>>, vector<1x32xf32>
    %69 = vector.broadcast %68 : vector<1x32xf32> to vector<16x32xf32>
    %70 = arith.addf %67, %69 : vector<16x32xf32>
    %71 = arith.truncf %70 : vector<16x32xf32> to vector<16x32xbf16>
    %c0_40 = arith.constant 0 : index
    %c0_41 = arith.constant 0 : index
    %c0_42 = arith.constant 0 : index
    %72 = vector.load %arg11[%c0_40, %c0_41, %c0_42] : memref<1x16x32xbf16, #tpu.memory_space<vmem>>, vector<1x16x32xbf16>
    %73 = vector.shape_cast %72 : vector<1x16x32xbf16> to vector<16x32xbf16>
    %74 = vector.shape_cast %71 : vector<16x32xbf16> to vector<1x16x32xbf16>
    tpu.vector_store %arg11[%c0_40, %c0_41, %c0_42], %74 {strides = array<i32>} : memref<1x16x32xbf16, #tpu.memory_space<vmem>>, vector<1x16x32xbf16>,
    return
  }
  func.func @transform_0(%arg0: i32, %arg1: i32) -> (i32, i32, i32) {
    %c0_i32 = arith.constant 0 : i32
    %c0_i32_0 = arith.constant 0 : i32
    return %arg0, %arg1, %c0_i32 : i32, i32, i32
  }
  func.func @transform_1(%arg0: i32, %arg1: i32) -> (i32, i32, i32) {
    %c0_i32 = arith.constant 0 : i32
    %c0_i32_0 = arith.constant 0 : i32
    %c0_i32_1 = arith.constant 0 : i32
    return %arg0, %c0_i32, %c0_i32_0 : i32, i32, i32
  }
  func.func @transform_2(%arg0: i32, %arg1: i32) -> (i32, i32) {
    %c0_i32 = arith.constant 0 : i32
    %c0_i32_0 = arith.constant 0 : i32
    %c0_i32_1 = arith.constant 0 : i32
    return %c0_i32, %c0_i32_0 : i32, i32
  }
  func.func @transform_3(%arg0: i32, %arg1: i32) -> (i32, i32) {
    %c0_i32 = arith.constant 0 : i32
    %c0_i32_0 = arith.constant 0 : i32
    %c0_i32_1 = arith.constant 0 : i32
    return %c0_i32, %c0_i32_0 : i32, i32
  }
  func.func @transform_4(%arg0: i32, %arg1: i32) -> (i32, i32) {
    %c0_i32 = arith.constant 0 : i32
    %c0_i32_0 = arith.constant 0 : i32
    %c0_i32_1 = arith.constant 0 : i32
    return %c0_i32, %c0_i32_0 : i32, i32
  }
  func.func @transform_5(%arg0: i32, %arg1: i32) -> (i32, i32) {
    %c0_i32 = arith.constant 0 : i32
    %c0_i32_0 = arith.constant 0 : i32
    %c0_i32_1 = arith.constant 0 : i32
    return %c0_i32, %c0_i32_0 : i32, i32
  }
  func.func @transform_6(%arg0: i32, %arg1: i32) -> (i32, i32) {
    %c0_i32 = arith.constant 0 : i32
    %c0_i32_0 = arith.constant 0 : i32
    %c0_i32_1 = arith.constant 0 : i32
    return %c0_i32, %c0_i32_0 : i32, i32
  }
  func.func @transform_7(%arg0: i32, %arg1: i32) -> (i32, i32) {
    %c0_i32 = arith.constant 0 : i32
    %c0_i32_0 = arith.constant 0 : i32
    %c0_i32_1 = arith.constant 0 : i32
    return %c0_i32, %c0_i32_0 : i32, i32
  }
  func.func @transform_8(%arg0: i32, %arg1: i32) -> (i32, i32) {
    %c0_i32 = arith.constant 0 : i32
    %c0_i32_0 = arith.constant 0 : i32
    %c0_i32_1 = arith.constant 0 : i32
    return %c0_i32, %c0_i32_0 : i32, i32
  }
  func.func @transform_9(%arg0: i32, %arg1: i32) -> (i32, i32, i32) {
    %c0_i32 = arith.constant 0 : i32
    %c0_i32_0 = arith.constant 0 : i32
    return %arg0, %arg1, %c0_i32 : i32, i32, i32
  }
  func.func @transform_10(%arg0: i32, %arg1: i32) -> (i32, i32, i32) {
    %c0_i32 = arith.constant 0 : i32
    %c0_i32_0 = arith.constant 0 : i32
    %c0_i32_1 = arith.constant 0 : i32
    return %arg0, %c0_i32, %c0_i32_0 : i32, i32, i32
  }
}

</mosaic_0001>

<llo_original>
// kernel: tpu_custom_call.1
$region0: #{tpu_custom_call.1}
  #allocation0 [shape = 'u32[]', space=smem, size = 0x4, offset = 0x4, fixed_abs, tag = 'smem constant byte address 0x4 - core index']
  #allocation1 [shape = 'u32[72,128]{1,0:T(1,128)}', space=vmem, size = 0x9000, scoped, tag = 'internal scratch']
  %s0 = inlined_call_operand.vmem [shape: bf16[4,16,128], index: 0, kind: input, shape index: {}]
  %s1 = inlined_call_operand.vmem [shape: f32[4,1,32], index: 1, kind: input, shape index: {}]
  %s2 = inlined_call_operand.vmem [shape: bf16[128,32], index: 2, kind: input, shape index: {}]
  %s3 = inlined_call_operand.vmem [shape: f32[1,32], index: 3, kind: input, shape index: {}]
  %s4 = inlined_call_operand.vmem [shape: f32[1,32], index: 4, kind: input, shape index: {}]
  %s5 = inlined_call_operand.vmem [shape: bf16[32,32], index: 5, kind: input, shape index: {}]
  %s6 = inlined_call_operand.vmem [shape: f32[1,32], index: 6, kind: input, shape index: {}]
  %s7 = inlined_call_operand.vmem [shape: bf16[32,32], index: 7, kind: input, shape index: {}]
  %s8 = inlined_call_operand.vmem [shape: f32[1,32], index: 8, kind: input, shape index: {}]
  %s9 = inlined_call_operand.hbm [shape: bf16[4,16,32], index: 9, kind: output, shape index: {0}]
  %s10 = inlined_call_operand.hbm [shape: f32[4,1,32], index: 10, kind: output, shape index: {1}]
  %11 = xla_tuple %s9, %s10
  %s12 = sld [smem:[#allocation0]]
  $region85: #{tpu_custom_call.1} parent=0
    _
  %s14 = ssub.s32 1, %s12
  %s15 = scalar_select 0, %s14, %s12
  $region1: #{tpu_custom_call.1} parent=0
    #allocation2 [shape = 'u8[8192]{0}', space=vmem, size = 0x2000, scoped, tag = 'output window, operand 0']
    #allocation3 [shape = 's32[2]{0}', space=sflag, size = 0x8, scoped, tag = 'scoped memory for tpu_custom_call.1']
    #allocation4 [shape = 'u8[1024]{0}', space=vmem, size = 0x400, scoped, tag = 'output window, operand 1']
    #allocation5 [shape = 's32[2]{0}', space=sflag, size = 0x8, scoped, tag = 'scoped memory for tpu_custom_call.1']
    %16 = vsyncpa [#allocation3], 0
    %s17 = scalar_lea.sflag [#allocation3], 1
    %18 = vsyncpa %s17, 0
    %19 = vsyncpa [#allocation5], 0
    %s20 = scalar_lea.sflag [#allocation5], 1
    %21 = vsyncpa %s20, 0
    loop: start=0, step=1, limit=6
    $region2: #{tpu_custom_call.1} parent=1 // loop_pre_header
      _
    $region3: #{tpu_custom_call.1} parent=1 // loop_header
      %s23 = sphi 0, %s27
      %p24 = scmp.ge.s32.totalorder %s23, 6
      %s30 = sphi 0, %s42
      %s31 = sphi 0, %s38
      %s32 = sphi 0, %s30
      %s33 = sphi 0, %s31
      %s34 = sphi 0, %s32
      %s35 = sphi 0, %s33
      %s47 = sphi 0, %s49
      %s50 = sphi 0, %s47
      %s51 = sphi 0, %s50
      %s67 = sphi 0, %s51
      %s73 = sphi 0, %s75
      %s76 = sphi 0, %s73
      %s77 = sphi 0, %s76
      %s93 = sphi 0, %s77
      %s97 = sphi 0, %s97
      %s99 = sphi 0, %s97
      %s100 = sphi 0, %s99
      %s114 = sphi 0, %s100
      %s118 = sphi 0, %s118
      %s120 = sphi 0, %s118
      %s121 = sphi 0, %s120
      %s135 = sphi 0, %s121
      %s139 = sphi 0, %s139
      %s141 = sphi 0, %s139
      %s142 = sphi 0, %s141
      %s156 = sphi 0, %s142
      %s160 = sphi 0, %s160
      %s162 = sphi 0, %s160
      %s163 = sphi 0, %s162
      %s177 = sphi 0, %s163
      %s181 = sphi 0, %s181
      %s183 = sphi 0, %s181
      %s184 = sphi 0, %s183
      %s198 = sphi 0, %s184
      %s202 = sphi 0, %s202
      %s204 = sphi 0, %s202
      %s205 = sphi 0, %s204
      %s219 = sphi 0, %s205
      %s223 = sphi 0, %s223
      %s225 = sphi 0, %s223
      %s226 = sphi 0, %s225
      %s240 = sphi 0, %s226
      %s248 = sphi 0, %s250
      %s251 = sphi 0, %s248
      %s252 = sphi 0, %s251
      %s268 = sphi 0, %s252
      %s274 = sphi 0, %s276
      %s277 = sphi 0, %s274
      %s278 = sphi 0, %s277
      %s294 = sphi 0, %s278
    $region4: #{tpu_custom_call.1} parent=1 // loop_header_branch
      %26 = sbr.rel (%p24) target = $region8
    $region5: #{tpu_custom_call.1} parent=1 // loop_body
      %s28 = ssub.s32 %s23, 1
      %s29 = ssub.s32 %s23, 2
      %s36 = sadd.s32 1, %s31
      %p37 = scmp.ge.s32.totalorder %s36, 1
      %s38 = scalar_select %p37, 0, %s36
      %s39 = sadd.s32 1, %s30
      %s40 = scalar_select %p37, %s39, %s30
      %p41 = scmp.ge.s32.totalorder %s40, 4
      %s42 = scalar_select %p41, 0, %s40
      %s43 = ssub.s32 %s30, %s42
      %s44 = ssub.s32 %s31, %s38
      %s45 = sor.u32 %s43, %s44
      %p46 = scmp.eq.s32.totalorder %s45, 0
      %s48 = sadd.s32 %s47, 1
      %s49 = scalar_select %p46, %s47, %s48
      %p52 = pneg %p46
      %p53 = scmp.eq.s32.totalorder %s23, 3
      %p54 = por %p52, %p53
      %p55 = scmp.ne.s32.totalorder %s47, %s50
      %p56 = scmp.eq.s32.totalorder %s23, 0
      %p57 = por %p55, %p56
      %p58 = scmp.ne.s32.totalorder %s47, %s50
      %p59 = scmp.eq.s32.totalorder %s28, 3
      %p60 = por %p58, %p59
      %p61 = scmp.ne.s32.totalorder %s50, %s51
      %p62 = scmp.eq.s32.totalorder %s28, 0
      %p63 = por %p61, %p62
      %p64 = scmp.ne.s32.totalorder %s50, %s51
      %p65 = scmp.eq.s32.totalorder %s29, 3
      %p66 = por %p64, %p65
      %p68 = scmp.ne.s32.totalorder %s51, %s67
      %p69 = scmp.eq.s32.totalorder %s29, 0
      %p70 = por %p68, %p69
      %s71 = ssub.s32 %s30, %s42
      %p72 = scmp.eq.s32.totalorder %s71, 0
      %s74 = sadd.s32 %s73, 1
      %s75 = scalar_select %p72, %s73, %s74
      %p78 = pneg %p72
      %p79 = scmp.eq.s32.totalorder %s23, 3
      %p80 = por %p78, %p79
      %p81 = scmp.ne.s32.totalorder %s73, %s76
      %p82 = scmp.eq.s32.totalorder %s23, 0
      %p83 = por %p81, %p82
      %p84 = scmp.ne.s32.totalorder %s73, %s76
      %p85 = scmp.eq.s32.totalorder %s28, 3
      %p86 = por %p84, %p85
      %p87 = scmp.ne.s32.totalorder %s76, %s77
      %p88 = scmp.eq.s32.totalorder %s28, 0
      %p89 = por %p87, %p88
      %p90 = scmp.ne.s32.totalorder %s76, %s77
      %p91 = scmp.eq.s32.totalorder %s29, 3
      %p92 = por %p90, %p91
      %p94 = scmp.ne.s32.totalorder %s77, %s93
      %p95 = scmp.eq.s32.totalorder %s29, 0
      %p96 = por %p94, %p95
      %s98 = sadd.s32 %s97, 1
      %p101 = scmp.eq.s32.totalorder %s23, 3
      %p102 = scmp.ne.s32.totalorder %s97, %s99
      %p103 = scmp.eq.s32.totalorder %s23, 0
      %p104 = por %p102, %p103
      %p105 = scmp.ne.s32.totalorder %s97, %s99
      %p106 = scmp.eq.s32.totalorder %s28, 3
      %p107 = por %p105, %p106
      %p108 = scmp.ne.s32.totalorder %s99, %s100
      %p109 = scmp.eq.s32.totalorder %s28, 0
      %p110 = por %p108, %p109
      %p111 = scmp.ne.s32.totalorder %s99, %s100
      %p112 = scmp.eq.s32.totalorder %s29, 3
      %p113 = por %p111, %p112
      %p115 = scmp.ne.s32.totalorder %s100, %s114
      %p116 = scmp.eq.s32.totalorder %s29, 0
      %p117 = por %p115, %p116
      %s119 = sadd.s32 %s118, 1
      %p122 = scmp.eq.s32.totalorder %s23, 3
      %p123 = scmp.ne.s32.totalorder %s118, %s120
      %p124 = scmp.eq.s32.totalorder %s23, 0
      %p125 = por %p123, %p124
      %p126 = scmp.ne.s32.totalorder %s118, %s120
      %p127 = scmp.eq.s32.totalorder %s28, 3
      %p128 = por %p126, %p127
      %p129 = scmp.ne.s32.totalorder %s120, %s121
      %p130 = scmp.eq.s32.totalorder %s28, 0
      %p131 = por %p129, %p130
      %p132 = scmp.ne.s32.totalorder %s120, %s121
      %p133 = scmp.eq.s32.totalorder %s29, 3
      %p134 = por %p132, %p133
      %p136 = scmp.ne.s32.totalorder %s121, %s135
      %p137 = scmp.eq.s32.totalorder %s29, 0
      %p138 = por %p136, %p137
      %s140 = sadd.s32 %s139, 1
      %p143 = scmp.eq.s32.totalorder %s23, 3
      %p144 = scmp.ne.s32.totalorder %s139, %s141
      %p145 = scmp.eq.s32.totalorder %s23, 0
      %p146 = por %p144, %p145
      %p147 = scmp.ne.s32.totalorder %s139, %s141
      %p148 = scmp.eq.s32.totalorder %s28, 3
      %p149 = por %p147, %p148
      %p150 = scmp.ne.s32.totalorder %s141, %s142
      %p151 = scmp.eq.s32.totalorder %s28, 0
      %p152 = por %p150, %p151
      %p153 = scmp.ne.s32.totalorder %s141, %s142
      %p154 = scmp.eq.s32.totalorder %s29, 3
      %p155 = por %p153, %p154
      %p157 = scmp.ne.s32.totalorder %s142, %s156
      %p158 = scmp.eq.s32.totalorder %s29, 0
      %p159 = por %p157, %p158
      %s161 = sadd.s32 %s160, 1
      %p164 = scmp.eq.s32.totalorder %s23, 3
      %p165 = scmp.ne.s32.totalorder %s160, %s162
      %p166 = scmp.eq.s32.totalorder %s23, 0
      %p167 = por %p165, %p166
      %p168 = scmp.ne.s32.totalorder %s160, %s162
      %p169 = scmp.eq.s32.totalorder %s28, 3
      %p170 = por %p168, %p169
      %p171 = scmp.ne.s32.totalorder %s162, %s163
      %p172 = scmp.eq.s32.totalorder %s28, 0
      %p173 = por %p171, %p172
      %p174 = scmp.ne.s32.totalorder %s162, %s163
      %p175 = scmp.eq.s32.totalorder %s29, 3
      %p176 = por %p174, %p175
      %p178 = scmp.ne.s32.totalorder %s163, %s177
      %p179 = scmp.eq.s32.totalorder %s29, 0
      %p180 = por %p178, %p179
      %s182 = sadd.s32 %s181, 1
      %p185 = scmp.eq.s32.totalorder %s23, 3
      %p186 = scmp.ne.s32.totalorder %s181, %s183
      %p187 = scmp.eq.s32.totalorder %s23, 0
      %p188 = por %p186, %p187
      %p189 = scmp.ne.s32.totalorder %s181, %s183
      %p190 = scmp.eq.s32.totalorder %s28, 3
      %p191 = por %p189, %p190
      %p192 = scmp.ne.s32.totalorder %s183, %s184
      %p193 = scmp.eq.s32.totalorder %s28, 0
      %p194 = por %p192, %p193
      %p195 = scmp.ne.s32.totalorder %s183, %s184
      %p196 = scmp.eq.s32.totalorder %s29, 3
      %p197 = por %p195, %p196
      %p199 = scmp.ne.s32.totalorder %s184, %s198
      %p200 = scmp.eq.s32.totalorder %s29, 0
      %p201 = por %p199, %p200
      %s203 = sadd.s32 %s202, 1
      %p206 = scmp.eq.s32.totalorder %s23, 3
      %p207 = scmp.ne.s32.totalorder %s202, %s204
      %p208 = scmp.eq.s32.totalorder %s23, 0
      %p209 = por %p207, %p208
      %p210 = scmp.ne.s32.totalorder %s202, %s204
      %p211 = scmp.eq.s32.totalorder %s28, 3
      %p212 = por %p210, %p211
      %p213 = scmp.ne.s32.totalorder %s204, %s205
      %p214 = scmp.eq.s32.totalorder %s28, 0
      %p215 = por %p213, %p214
      %p216 = scmp.ne.s32.totalorder %s204, %s205
      %p217 = scmp.eq.s32.totalorder %s29, 3
      %p218 = por %p216, %p217
      %p220 = scmp.ne.s32.totalorder %s205, %s219
      %p221 = scmp.eq.s32.totalorder %s29, 0
      %p222 = por %p220, %p221
      %s224 = sadd.s32 %s223, 1
      %p227 = scmp.eq.s32.totalorder %s23, 3
      %p228 = scmp.ne.s32.totalorder %s223, %s225
      %p229 = scmp.eq.s32.totalorder %s23, 0
      %p230 = por %p228, %p229
      %p231 = scmp.ne.s32.totalorder %s223, %s225
      %p232 = scmp.eq.s32.totalorder %s28, 3
      %p233 = por %p231, %p232
      %p234 = scmp.ne.s32.totalorder %s225, %s226
      %p235 = scmp.eq.s32.totalorder %s28, 0
      %p236 = por %p234, %p235
      %p237 = scmp.ne.s32.totalorder %s225, %s226
      %p238 = scmp.eq.s32.totalorder %s29, 3
      %p239 = por %p237, %p238
      %p241 = scmp.ne.s32.totalorder %s226, %s240
      %p242 = scmp.eq.s32.totalorder %s29, 0
      %p243 = por %p241, %p242
      %s244 = ssub.s32 %s30, %s42
      %s245 = ssub.s32 %s31, %s38
      %s246 = sor.u32 %s244, %s245
      %p247 = scmp.eq.s32.totalorder %s246, 0
      %s249 = sadd.s32 %s248, 1
      %s250 = scalar_select %p247, %s248, %s249
      %p253 = pneg %p247
      %p254 = scmp.eq.s32.totalorder %s23, 3
      %p255 = por %p253, %p254
      %p256 = scmp.ne.s32.totalorder %s248, %s251
      %p257 = scmp.eq.s32.totalorder %s23, 0
      %p258 = por %p256, %p257
      %p259 = scmp.ne.s32.totalorder %s248, %s251
      %p260 = scmp.eq.s32.totalorder %s28, 3
      %p261 = por %p259, %p260
      %p262 = scmp.ne.s32.totalorder %s251, %s252
      %p263 = scmp.eq.s32.totalorder %s28, 0
      %p264 = por %p262, %p263
      %p265 = scmp.ne.s32.totalorder %s251, %s252
      %p266 = scmp.eq.s32.totalorder %s29, 3
      %p267 = por %p265, %p266
      %p269 = scmp.ne.s32.totalorder %s252, %s268
      %p270 = scmp.eq.s32.totalorder %s29, 0
      %p271 = por %p269, %p270
      %s272 = ssub.s32 %s30, %s42
      %p273 = scmp.eq.s32.totalorder %s272, 0
      %s275 = sadd.s32 %s274, 1
      %s276 = scalar_select %p273, %s274, %s275
      %p279 = pneg %p273
      %p280 = scmp.eq.s32.totalorder %s23, 3
      %p281 = por %p279, %p280
      %p282 = scmp.ne.s32.totalorder %s274, %s277
      %p283 = scmp.eq.s32.totalorder %s23, 0
      %p284 = por %p282, %p283
      %p285 = scmp.ne.s32.totalorder %s274, %s277
      %p286 = scmp.eq.s32.totalorder %s28, 3
      %p287 = por %p285, %p286
      %p288 = scmp.ne.s32.totalorder %s277, %s278
      %p289 = scmp.eq.s32.totalorder %s28, 0
      %p290 = por %p288, %p289
      %p291 = scmp.ne.s32.totalorder %s277, %s278
      %p292 = scmp.eq.s32.totalorder %s29, 3
      %p293 = por %p291, %p292
      %p295 = scmp.ne.s32.totalorder %s278, %s294
      %p296 = scmp.eq.s32.totalorder %s29, 0
      %p297 = por %p295, %p296
      %p298 = scmp.le.s32.totalorder 1, %s23
      %p299 = scmp.lt.s32.totalorder %s23, 5
      %p300 = pnand %p298, %p299
      %p301 = pneg %p300
      // Predicated region
      $region9: #{tpu_custom_call.1} parent=5 // pred_check
        _
      $region10: #{tpu_custom_call.1} parent=5 // pred_check_branch
        %303 = sbr.rel (%p300) target = $region12
      $region11: #{tpu_custom_call.1} parent=5 // pred_region
        %s304 = ssub.s32 %s23, 1
        // Predicated region
        $region13: #{tpu_custom_call.1} parent=11 // pred_check
          %p305 = pneg %p110
        $region14: #{tpu_custom_call.1} parent=11 // pred_check_branch
          %307 = sbr.rel (%p305) target = $region16
        $region15: #{tpu_custom_call.1} parent=11 // pred_region
          _
        $region16: #{tpu_custom_call.1} parent=11 // pred_fallthru
          _
        // Predicated region
        $region17: #{tpu_custom_call.1} parent=11 // pred_check
          %p308 = pneg %p131
        $region18: #{tpu_custom_call.1} parent=11 // pred_check_branch
          %310 = sbr.rel (%p308) target = $region20
        $region19: #{tpu_custom_call.1} parent=11 // pred_region
          _
        $region20: #{tpu_custom_call.1} parent=11 // pred_fallthru
          _
        // Predicated region
        $region21: #{tpu_custom_call.1} parent=11 // pred_check
          %p311 = pneg %p152
        $region22: #{tpu_custom_call.1} parent=11 // pred_check_branch
          %313 = sbr.rel (%p311) target = $region24
        $region23: #{tpu_custom_call.1} parent=11 // pred_region
          _
        $region24: #{tpu_custom_call.1} parent=11 // pred_fallthru
          _
        // Predicated region
        $region25: #{tpu_custom_call.1} parent=11 // pred_check
          %p314 = pneg %p173
        $region26: #{tpu_custom_call.1} parent=11 // pred_check_branch
          %316 = sbr.rel (%p314) target = $region28
        $region27: #{tpu_custom_call.1} parent=11 // pred_region
          _
        $region28: #{tpu_custom_call.1} parent=11 // pred_fallthru
          _
        // Predicated region
        $region29: #{tpu_custom_call.1} parent=11 // pred_check
          %p317 = pneg %p194
        $region30: #{tpu_custom_call.1} parent=11 // pred_check_branch
          %319 = sbr.rel (%p317) target = $region32
        $region31: #{tpu_custom_call.1} parent=11 // pred_region
          _
        $region32: #{tpu_custom_call.1} parent=11 // pred_fallthru
          _
        // Predicated region
        $region33: #{tpu_custom_call.1} parent=11 // pred_check
          %p320 = pneg %p215
        $region34: #{tpu_custom_call.1} parent=11 // pred_check_branch
          %322 = sbr.rel (%p320) target = $region36
        $region35: #{tpu_custom_call.1} parent=11 // pred_region
          _
        $region36: #{tpu_custom_call.1} parent=11 // pred_fallthru
          _
        // Predicated region
        $region37: #{tpu_custom_call.1} parent=11 // pred_check
          %p323 = pneg %p236
        $region38: #{tpu_custom_call.1} parent=11 // pred_check_branch
          %325 = sbr.rel (%p323) target = $region40
        $region39: #{tpu_custom_call.1} parent=11 // pred_region
          _
        $region40: #{tpu_custom_call.1} parent=11 // pred_fallthru
          _
      $region12: #{tpu_custom_call.1} parent=5 // pred_fallthru
        _
      %p326 = scmp.lt.s32.totalorder %s23, 4
      // Predicated region
      $region41: #{tpu_custom_call.1} parent=5 // pred_check
        %p327 = pneg %p326
      $region42: #{tpu_custom_call.1} parent=5 // pred_check_branch
        %329 = sbr.rel (%p327) target = $region44
      $region43: #{tpu_custom_call.1} parent=5 // pred_region
        // Predicated region
        $region45: #{tpu_custom_call.1} parent=43 // pred_check
          %p330 = pneg %p57
        $region46: #{tpu_custom_call.1} parent=43 // pred_check_branch
          %332 = sbr.rel (%p330) target = $region48
        $region47: #{tpu_custom_call.1} parent=43 // pred_region
          %s333 = smul.u32 2, %s31
          %p334 = scmp.lt.s32.totalorder %s30, 3
          %s335 = scalar_select %p334, %s30, 3
          %p336 = scmp.lt.s32.totalorder %s333, 1
          %s337 = scalar_select %p336, %s333, 1
          %s338 = smul.addr %s335, 2
          %s339 = sadd.s32 %s337, %s338
          %s340 = smul.addr %s339, 4
          %s341 = scalar_lea.vmem %s0, %s340
          %s342 = smul.u32 2, %s31
        $region48: #{tpu_custom_call.1} parent=43 // pred_fallthru
          _
        // Predicated region
        $region49: #{tpu_custom_call.1} parent=43 // pred_check
          %p343 = pneg %p83
        $region50: #{tpu_custom_call.1} parent=43 // pred_check_branch
          %345 = sbr.rel (%p343) target = $region52
        $region51: #{tpu_custom_call.1} parent=43 // pred_region
          %p346 = scmp.lt.s32.totalorder %s30, 3
          %s347 = scalar_select %p346, %s30, 3
          %s348 = scalar_lea.vmem %s1, %s347
        $region52: #{tpu_custom_call.1} parent=43 // pred_fallthru
          _
      $region44: #{tpu_custom_call.1} parent=5 // pred_fallthru
        _
      %p349 = scmp.le.s32.totalorder 1, %s23
      %p350 = scmp.lt.s32.totalorder %s23, 5
      %p351 = pnand %p349, %p350
      %p352 = pneg %p351
      // Predicated region
      $region53: #{tpu_custom_call.1} parent=5 // pred_check
        _
      $region54: #{tpu_custom_call.1} parent=5 // pred_check_branch
        %354 = sbr.rel (%p351) target = $region56
      $region55: #{tpu_custom_call.1} parent=5 // pred_region
        %s355 = ssub.s32 %s23, 1
        %s356 = smul.u32 2, %s33
        %p357 = scmp.lt.s32.totalorder %s32, 3
        %s358 = scalar_select %p357, %s32, 3
        %p359 = scmp.lt.s32.totalorder %s356, 1
        %s360 = scalar_select %p359, %s356, 1
        %s361 = smul.addr %s358, 2
        %s362 = sadd.s32 %s360, %s361
        %s363 = smul.addr %s362, 4
        %s364 = scalar_lea.vmem %s0, %s363
        %p365 = pneg %p63
        %p366 = pneg %p60
        %p367 = scmp.lt.s32.totalorder %s32, 3
        %s368 = scalar_select %p367, %s32, 3
        %s369 = scalar_lea.vmem %s1, %s368
        %p370 = pneg %p89
        %p371 = pneg %p86
        %p372 = pneg %p110
        %p373 = pneg %p107
        %p374 = pneg %p131
        %p375 = pneg %p128
        %p376 = pneg %p152
        %p377 = pneg %p149
        %p378 = pneg %p173
        %p379 = pneg %p170
        %p380 = pneg %p194
        %p381 = pneg %p191
        %p382 = pneg %p215
        %p383 = pneg %p212
        %p384 = pneg %p236
        %p385 = pneg %p233
        %p386 = pneg %p264
        %p387 = pneg %p261
        %s388 = sand.u32 %s251, 1
        %s389 = scalar_lea.sflag [#allocation3], %s388
        %s390 = sand.u32 %s251, 1
        %s391 = smul.addr %s390, 8
        %s392 = scalar_lea.vmem [#allocation2], %s391
        %p393 = pneg %p290
        %p394 = pneg %p287
        %s395 = sand.u32 %s277, 1
        %s396 = scalar_lea.sflag [#allocation5], %s395
        %s397 = sand.u32 %s277, 1
        %s398 = scalar_lea.vmem [#allocation4], %s397
        %s399 = smul.u32 2, %s33
        %p400 = scmp.lt.s32.totalorder %s32, 3
        %s401 = scalar_select %p400, %s32, 3
        %p402 = scmp.lt.s32.totalorder %s399, 1
        %s403 = scalar_select %p402, %s399, 1
        %s404 = smul.addr %s401, 2
        %s405 = sadd.s32 %s403, %s404
        %s406 = smul.addr %s405, 4
        %s407 = scalar_lea.vmem %s0, %s406
        %s408 = smul.u32 2, %s33
        %p409 = scmp.lt.s32.totalorder %s32, 3
        %s410 = scalar_select %p409, %s32, 3
        %s411 = scalar_lea.vmem %s1, %s410
        %s412 = smul.u32 2, %s33
        %v414 = vld [vmem:[%s407] sm:$0xf]
        %v415 = vld [vmem:[%s407 + $0x4] sm:$0xf]
        %v416 = vld [vmem:[%s2] sm:$0xf]
        %v417 = vld [vmem:[%s2 + $0x4] sm:$0xf]
        %v418 = vld [vmem:[%s2 + $0x8] sm:$0xf]
        %v419 = vld [vmem:[%s2 + $0xc] sm:$0xf]
        %v420 = vld [vmem:[%s2 + $0x10] sm:$0xf]
        %v421 = vld [vmem:[%s2 + $0x14] sm:$0xf]
        %v422 = vld [vmem:[%s2 + $0x18] sm:$0xf]
        %v423 = vld [vmem:[%s2 + $0x1c] sm:$0xf]
        %v424 = vld [vmem:[%s2 + $0x20] sm:$0xf]
        %v425 = vld [vmem:[%s2 + $0x24] sm:$0xf]
        %v426 = vld [vmem:[%s2 + $0x28] sm:$0xf]
        %v427 = vld [vmem:[%s2 + $0x2c] sm:$0xf]
        %v428 = vld [vmem:[%s2 + $0x30] sm:$0xf]
        %v429 = vld [vmem:[%s2 + $0x34] sm:$0xf]
        %v430 = vld [vmem:[%s2 + $0x38] sm:$0xf]
        %v431 = vld [vmem:[%s2 + $0x3c] sm:$0xf]
        %v432 = vld [vmem:[%s411] sm:$0x1]
        %v434 = vperm.slane %v432, 0
        %v438 = vunpack.c.l.b16 %v414
        %v439 = vunpack.c.l.b16 %v415
        %v440 = vpack.c.b16 %v439, %v438
        %v458 = vunpack.c.l.b16 %v416
        %v459 = vunpack.c.l.b16 %v417
        %v460 = vunpack.c.l.b16 %v418
        %v461 = vunpack.c.l.b16 %v419
        %v462 = vunpack.c.l.b16 %v420
        %v463 = vunpack.c.l.b16 %v421
        %v464 = vunpack.c.l.b16 %v422
        %v465 = vunpack.c.l.b16 %v423
        %v466 = vunpack.c.l.b16 %v424
        %v467 = vunpack.c.l.b16 %v425
        %v468 = vunpack.c.l.b16 %v426
        %v469 = vunpack.c.l.b16 %v427
        %v470 = vunpack.c.l.b16 %v428
        %v471 = vunpack.c.l.b16 %v429
        %v472 = vunpack.c.l.b16 %v430
        %v473 = vunpack.c.l.b16 %v431
        %v474 = vpack.c.b16 %v459, %v458
        %v475 = vpack.c.b16 %v461, %v460
        %v476 = vpack.c.b16 %v463, %v462
        %v477 = vpack.c.b16 %v465, %v464
        %v478 = vpack.c.b16 %v467, %v466
        %v479 = vpack.c.b16 %v469, %v468
        %v480 = vpack.c.b16 %v471, %v470
        %v481 = vpack.c.b16 %v473, %v472
        %490 = vmatpush.bf16.msra.mxu0 %v481
        %491 = vmatpush.bf16.msra.mxu0 %v480
        %492 = vmatpush.bf16.msra.mxu0 %v479
        %493 = vmatpush.bf16.msra.mxu0 %v478
        %494 = vmatpush.bf16.msra.mxu0 %v477
        %495 = vmatpush.bf16.msra.mxu0 %v476
        %496 = vmatpush.bf16.msra.mxu0 %v475
        %497 = vmatpush.bf16.msra.mxu0 %v474
        %498 = vmatmul.bf16.gmra.mxu0 %v440
        %v499 = vpop.f32.mrf.mxu0
        %v500 = vadd.f32 %v434, %v499
        %v501 = vpop.f32.mrf.mxu0
        %v502 = vadd.f32 %v434, %v501
        %503 = vdwg.mxu0
        %vm504 = vcmask 261120
        %v505 = vsel %vm504, %v500, 0.0
        %506 = vadd.xlane.f32.xlu0 %v505
        %v507 = vpop.xlane.xlu0 %506
        %v508 = vsel %vm504, %v502, 0.0
        %509 = vadd.xlane.f32.xlu0 %v508
        %v510 = vpop.xlane.xlu0 %509
        %v511 = vrcp.pop 32.0
        %v512 = vmul.f32 32.0, %v511
        %v513 = vsub.f32 1.0, %v512
        %v514 = vmul.f32 %v511, %v513
        %v515 = vadd.f32 %v511, %v514
        %vm516 = vweird.f32 %v511
        %v517 = vsel %vm516, %v511, %v515
        %v518 = vmul.f32 %v507, %v517
        %v519 = vmul.f32 %v510, %v517
        %v520 = vmul.f32 %v500, %v500
        %v521 = vmul.f32 %v502, %v502
        %v522 = vsel %vm504, %v520, 0.0
        %523 = vadd.xlane.f32.xlu0 %v522
        %v524 = vpop.xlane.xlu0 %523
        %v525 = vsel %vm504, %v521, 0.0
        %526 = vadd.xlane.f32.xlu0 %v525
        %v527 = vpop.xlane.xlu0 %526
        %v528 = vmul.f32 %v524, %v517
        %v529 = vmul.f32 %v527, %v517
        %v530 = vmul.f32 %v518, %v518
        %v531 = vmul.f32 %v519, %v519
        %v532 = vsub.f32 %v528, %v530
        %v533 = vsub.f32 %v529, %v531
        %v534 = vsub.f32 %v500, %v518
        %v535 = vsub.f32 %v502, %v519
        %v536 = vadd.f32 %v532, 1e-05
        %v537 = vadd.f32 %v533, 1e-05
        %v538 = vrsqrt.pop %v536
        %v539 = vmul.f32 %v538, %v536
        %v540 = vmul.f32 %v539, %v538
        %v541 = vmul.f32 0.5, %v540
        %v542 = vsub.f32 1.5, %v541
        %v543 = vmul.f32 %v538, %v542
        %vm544 = vweird.f32 %v536
        %vm545 = vweird.f32 %v538
        %vm546 = vmor %vm544, %vm545
        %v547 = vsel %vm546, %v538, %v543
        %v548 = vrsqrt.pop %v537
        %v549 = vmul.f32 %v548, %v537
        %v550 = vmul.f32 %v549, %v548
        %v551 = vmul.f32 0.5, %v550
        %v552 = vsub.f32 1.5, %v551
        %v553 = vmul.f32 %v548, %v552
        %vm554 = vweird.f32 %v537
        %vm555 = vweird.f32 %v548
        %vm556 = vmor %vm554, %vm555
        %v557 = vsel %vm556, %v548, %v553
        %v558 = vmul.f32 %v534, %v547
        %v559 = vmul.f32 %v535, %v557
        %v560 = vld [vmem:[%s3] sm:$0x1]
        %v562 = vperm.slane %v560, 0
        %v564 = vmul.f32 %v558, %v562
        %v565 = vmul.f32 %v559, %v562
        %v566 = vld [vmem:[%s4] sm:$0x1]
        %v568 = vperm.slane %v566, 0
        %v570 = vadd.f32 %v564, %v568
        %v571 = vadd.f32 %v565, %v568
        %p572 = scmp.eq.s32.totalorder %s33, 0
        // Predicated region
        $region57: #{tpu_custom_call.1} parent=55 // pred_check
          %p573 = pneg %p572
        $region58: #{tpu_custom_call.1} parent=55 // pred_check_branch
          %575 = sbr.rel (%p573) target = $region60
        $region59: #{tpu_custom_call.1} parent=55 // pred_region
          %vm576 = vcmask 253952
          %577 = vst.msk [vmem:[%s398] sm:$0x1] %vm576, 0.0
        $region60: #{tpu_custom_call.1} parent=55 // pred_fallthru
          _
        %v578 = vld [vmem:[%s398] sm:$0x1]
        %v579 = vsel %vm504, %v570, 0.0
        %v580 = vsel %vm504, %v571, 0.0
        %v581 = vadd.f32 %v579, %v580
        %v582 = vrot.slane %v581, 4
        %v583 = vadd.f32 %v581, %v582
        %v584 = vrot.slane %v583, 2
        %v585 = vadd.f32 %v583, %v584
        %v586 = vrot.slane %v585, 1
        %v587 = vadd.f32 %v585, %v586
        %v588 = vadd.f32 %v578, %v587
        %vm589 = vcmask 253952
        %590 = vst.msk [vmem:[%s398] sm:$0x1] %vm589, %v588
        // Predicated region
        $region61: #{tpu_custom_call.1} parent=55 // pred_check
          %p591 = pneg %p572
        $region62: #{tpu_custom_call.1} parent=55 // pred_check_branch
          %593 = sbr.rel (%p591) target = $region64
        $region63: #{tpu_custom_call.1} parent=55 // pred_region
          %v594 = vld [vmem:[%s398] sm:$0x1]
          %v595 = vmul.f32 %v594, 0.0625
          %596 = vst.msk [vmem:[%s398] sm:$0x1] %vm589, %v595
        $region64: #{tpu_custom_call.1} parent=55 // pred_fallthru
          _
        %v597 = vpack.c.bf16 %v571, %v570
        %v598 = vld [vmem:[%s5] sm:$0xf]
        %v599 = vld [vmem:[%s5 + $0x4] sm:$0xf]
        %v600 = vld [vmem:[%s5 + $0x8] sm:$0xf]
        %v601 = vld [vmem:[%s5 + $0xc] sm:$0xf]
        %v602 = vld [vmem:[%s6] sm:$0x1]
        %v604 = vperm.slane %v602, 0
        %v610 = vunpack.c.l.b16 %v598
        %v611 = vunpack.c.l.b16 %v599
        %v612 = vunpack.c.l.b16 %v600
        %v613 = vunpack.c.l.b16 %v601
        %v614 = vpack.c.b16 %v611, %v610
        %v615 = vpack.c.b16 %v613, %v612
        %v619 = vsel %vm504, %v597, 0
        %621 = vmatpush.bf16.msra.mxu0 0
        %622 = vmatpush.bf16.msra.mxu0 0
        %623 = vmatpush.bf16.msra.mxu0 0
        %624 = vmatpush.bf16.msra.mxu0 0
        %625 = vmatpush.bf16.msra.mxu0 0
        %626 = vmatpush.bf16.msra.mxu0 0
        %627 = vmatpush.bf16.msra.mxu0 %v615
        %628 = vmatpush.bf16.msra.mxu0 %v614
        %629 = vmatmul.bf16.gmra.mxu0 %v619
        %v630 = vpop.f32.mrf.mxu0
        %v631 = vadd.f32 %v604, %v630
        %v632 = vpop.f32.mrf.mxu0
        %v633 = vadd.f32 %v604, %v632
        %634 = vdwg.mxu0
        %v635 = vmul.f32 %v631, %v631
        %v636 = vmul.f32 %v633, %v633
        %v637 = vmul.f32 %v631, %v635
        %v638 = vmul.f32 %v633, %v636
        %v639 = vmul.f32 %v637, 0.044715
        %v640 = vmul.f32 %v638, 0.044715
        %v641 = vadd.f32 %v631, %v639
        %v642 = vadd.f32 %v633, %v640
        %v643 = vmul.f32 %v641, 0.7978846
        %v644 = vmul.f32 %v642, 0.7978846
        %v645 = vtanh.pop %v643
        %v646 = vtanh.pop %v644
        %v647 = vadd.f32 %v645, 1.0
        %v648 = vadd.f32 %v646, 1.0
        %v649 = vmul.f32 %v647, 0.5
        %v650 = vmul.f32 %v648, 0.5
        %v651 = vmul.f32 %v631, %v649
        %v652 = vmul.f32 %v633, %v650
        %v653 = vpack.c.bf16 %v652, %v651
        %v654 = vld [vmem:[%s7] sm:$0xf]
        %v655 = vld [vmem:[%s7 + $0x4] sm:$0xf]
        %v656 = vld [vmem:[%s7 + $0x8] sm:$0xf]
        %v657 = vld [vmem:[%s7 + $0xc] sm:$0xf]
        %v658 = vld [vmem:[%s8] sm:$0x1]
        %v660 = vperm.slane %v658, 0
        %v666 = vunpack.c.l.b16 %v654
        %v667 = vunpack.c.l.b16 %v655
        %v668 = vunpack.c.l.b16 %v656
        %v669 = vunpack.c.l.b16 %v657
        %v670 = vpack.c.b16 %v667, %v666
        %v671 = vpack.c.b16 %v669, %v668
        %v675 = vsel %vm504, %v653, 0
        %677 = vmatpush.bf16.msra.mxu0 0
        %678 = vmatpush.bf16.msra.mxu0 0
        %679 = vmatpush.bf16.msra.mxu0 0
        %680 = vmatpush.bf16.msra.mxu0 0
        %681 = vmatpush.bf16.msra.mxu0 0
        %682 = vmatpush.bf16.msra.mxu0 0
        %683 = vmatpush.bf16.msra.mxu0 %v671
        %684 = vmatpush.bf16.msra.mxu0 %v670
        %685 = vmatmul.bf16.gmra.mxu0 %v675
        %v686 = vpop.f32.mrf.mxu0
        %v687 = vadd.f32 %v660, %v686
        %v688 = vpop.f32.mrf.mxu0
        %v689 = vadd.f32 %v660, %v688
        %690 = vdwg.mxu0
        %v691 = vpack.c.bf16 %v687, %v687
        %v692 = vpack.c.bf16 %v689, %v689
        %vm693 = vcmask 257024
        %694 = vst.msk [vmem:[%s392] sm:$0xf] %vm693, %v691
        %695 = vst.msk [vmem:[%s392 + $0x4] sm:$0xf] %vm693, %v692
        %s696 = sand.u32 %s251, 1
        %s697 = scalar_lea.sflag [#allocation3], %s696
        %s698 = sand.u32 %s251, 1
        %s699 = smul.addr %s698, 8
        %s700 = scalar_lea.vmem [#allocation2], %s699
        %s701 = sand.u32 %s277, 1
        %s702 = scalar_lea.sflag [#allocation5], %s701
        %s703 = sand.u32 %s277, 1
        %s704 = scalar_lea.vmem [#allocation4], %s703
        // Predicated region
        $region65: #{tpu_custom_call.1} parent=55 // pred_check
          %p705 = pneg %p261
        $region66: #{tpu_custom_call.1} parent=55 // pred_check_branch
          %707 = sbr.rel (%p705) target = $region68
        $region67: #{tpu_custom_call.1} parent=55 // pred_region
          %s708 = smul.u32 2, %s33
          %710 = vsyncadd %s697, 0
          %s711 = smul.addr %s32, 2
          %s712 = sadd.s32 %s708, %s711
          %s713 = smul.addr %s712, 4
          %s714 = scalar_lea.hbm %s9, %s713
          %s715 = sshll.u32 %s700, 4
          %s716 = int_to_ptr.vmem [resolvable:$true] %s715
          %s717 = sshll.u32 %s714, 4
          %s718 = int_to_ptr.hbm [resolvable:$true] %s717
          %723 = dma.vmem_to_hbm [thread:$0]  %s716, 128, %s718, %s697, 64, 64, 4
        $region68: #{tpu_custom_call.1} parent=55 // pred_fallthru
          _
        // Predicated region
        $region69: #{tpu_custom_call.1} parent=55 // pred_check
          %p724 = pneg %p287
        $region70: #{tpu_custom_call.1} parent=55 // pred_check_branch
          %726 = sbr.rel (%p724) target = $region72
        $region71: #{tpu_custom_call.1} parent=55 // pred_region
          %728 = vsyncadd %s702, 0
          %s729 = scalar_lea.hbm %s10, %s32
          %s731 = sshll.u32 %s704, 4
          %s732 = int_to_ptr.vmem [resolvable:$true] %s731
          %s733 = sshll.u32 %s729, 4
          %s734 = int_to_ptr.hbm [resolvable:$true] %s733
          %736 = dma.vmem_to_hbm [thread:$0]  %s732, 16, %s734, %s702
        $region72: #{tpu_custom_call.1} parent=55 // pred_fallthru
          _
      $region56: #{tpu_custom_call.1} parent=5 // pred_fallthru
        _
      %p737 = scmp.le.s32.totalorder 2, %s23
      // Predicated region
      $region73: #{tpu_custom_call.1} parent=5 // pred_check
        %p738 = pneg %p737
      $region74: #{tpu_custom_call.1} parent=5 // pred_check_branch
        %740 = sbr.rel (%p738) target = $region76
      $region75: #{tpu_custom_call.1} parent=5 // pred_region
        %s741 = ssub.s32 %s23, 2
        // Predicated region
        $region77: #{tpu_custom_call.1} parent=75 // pred_check
          %p742 = pneg %p267
        $region78: #{tpu_custom_call.1} parent=75 // pred_check_branch
          %744 = sbr.rel (%p742) target = $region80
        $region79: #{tpu_custom_call.1} parent=75 // pred_region
          %s745 = sand.u32 %s252, 1
          %s746 = scalar_lea.sflag [#allocation3], %s745
          %s747 = sand.u32 %s252, 1
          %s748 = smul.addr %s747, 8
          %s749 = scalar_lea.vmem [#allocation2], %s748
          %751 = dma.done %s746, 128
        $region80: #{tpu_custom_call.1} parent=75 // pred_fallthru
          _
        // Predicated region
        $region81: #{tpu_custom_call.1} parent=75 // pred_check
          %p752 = pneg %p293
        $region82: #{tpu_custom_call.1} parent=75 // pred_check_branch
          %754 = sbr.rel (%p752) target = $region84
        $region83: #{tpu_custom_call.1} parent=75 // pred_region
          %s755 = sand.u32 %s278, 1
          %s756 = scalar_lea.sflag [#allocation5], %s755
          %s757 = sand.u32 %s278, 1
          %s758 = scalar_lea.vmem [#allocation4], %s757
          %760 = dma.done %s756, 16
        $region84: #{tpu_custom_call.1} parent=75 // pred_fallthru
          _
      $region76: #{tpu_custom_call.1} parent=5 // pred_fallthru
        _
    $region6: #{tpu_custom_call.1} parent=1 // loop_footer
      %s27 = sadd.s32 1, %s23
    $region7: #{tpu_custom_call.1} parent=1 // loop_footer_branch
      %22 = sbr.rel target = $region3
    $region8: #{tpu_custom_call.1} parent=1 // loop_exit
      _
    %761 = vsyncpa [#allocation3], 1
    %s762 = scalar_lea.sflag [#allocation3], 1
    %763 = vsyncpa %s762, 1
    %764 = vsyncpa [#allocation5], 1
    %s765 = scalar_lea.sflag [#allocation5], 1
    %766 = vsyncpa %s765, 1

</llo_original>
